<compile_context>
chip_gen: v6e
topology: v6e:2x2x1
jax: 0.10.0
libtpu: 0.0.40
codegen_flags: <defaults>
</compile_context>

<pallas_src>
import functools

import jax
import jax.numpy as jnp
from jax.experimental import pallas as pl
from jax.experimental.pallas import tpu as pltpu

_NEG_INF = -1e30  # finite mask for padded softmax columns (avoids inf-inf NaNs)


def _round_up(x, m):
    return (x + m - 1) // m * m


def _vmem_cap_bytes():
    try:
        return int(pltpu.get_tpu_info().vmem_capacity_bytes)
    except Exception:
        return 64 << 20  # conservative: v7x has 64 MiB per TensorCore


def _vmem_limit(needed_bytes):
    cap = _vmem_cap_bytes()
    limit = int(needed_bytes * 1.25) + (16 << 20)  # headroom for Mosaic internals
    return max(32 << 20, min(limit, int(cap * 0.85)))


# ---------------------------------------------------------------------------
# Kernel 1: fused single-pass path (fused weight VMEM-resident).
# ---------------------------------------------------------------------------
def _qnet_fused_kernel(h_ref, w_ref, b_ref,
                       logits_ref, logp_ref, beta_ref, beta_logp_ref, q_ref,
                       *, n_pad, n_items):
    # One MXU pass over columns = [logits | adv | beta | v-slot(128 lanes)].
    y = jnp.dot(h_ref[...], w_ref[...], preferred_element_type=jnp.float32)
    y = y + b_ref[...]

    logits = y[:, 0 * n_pad:1 * n_pad]
    adv = y[:, 1 * n_pad:2 * n_pad]
    beta = y[:, 2 * n_pad:3 * n_pad]
    # v-slot: only lane 0 carries v (other lanes have zero weights & bias), so a
    # cheap XLU lane-reduction recovers it exactly as a (tile_b, 1) column.
    v_col = jnp.sum(y[:, 3 * n_pad:], axis=1, keepdims=True)

    # mean over the *real* item columns; padded adv columns are exactly 0.
    adv_mean = jnp.sum(adv, axis=1, keepdims=True) * (1.0 / n_items)
    q = adv + (v_col - adv_mean)  # single lane-broadcast of a (tile_b, 1)

    def _log_softmax(x):
        m = jnp.max(x, axis=1, keepdims=True)
        s = x - m
        return s - jnp.log(jnp.sum(jnp.exp(s), axis=1, keepdims=True))

    od = logits_ref.dtype
    logits_ref[...] = logits.astype(od)
    logp_ref[...] = _log_softmax(logits).astype(od)
    beta_ref[...] = beta.astype(od)
    beta_logp_ref[...] = _log_softmax(beta).astype(od)
    q_ref[...] = q.astype(od)


# ---------------------------------------------------------------------------
# Kernel 2: N-tiled weight-streaming path (production item_num / v7x).
# ---------------------------------------------------------------------------
def _qnet_ntiled_kernel(h_ref, w_ref, b_ref, wv_ref, bv_ref,
                        logits_ref, logp_ref, beta_ref, beta_logp_ref, q_ref,
                        acc_ref,
                        *, tile_n, n_tiles, n_items):
    j = pl.program_id(1)
    # Stream this item-tile's fused [logits_j | adv_j | beta_j] columns through
    # the MXU and stash the raw f32 result; stats + outputs finalize on the
    # last N step (scratch persists across the "arbitrary" j axis).
    acc_ref[j] = (jnp.dot(h_ref[...], w_ref[...],
                          preferred_element_type=jnp.float32) + b_ref[...])

    @pl.when(j == n_tiles - 1)
    def _finalize():
        # v: only lane 0 of the 128-wide slot is populated -> exact lane-sum.
        v_full = (jnp.dot(h_ref[...], wv_ref[...],
                          preferred_element_type=jnp.float32) + bv_ref[...])
        v_col = jnp.sum(v_full, axis=1, keepdims=True)

        # Pass 1: per-row max for both softmax heads + running advantage sum.
        m_l = m_b = a_sum = None
        for jj in range(n_tiles):  # static unroll over VMEM-resident scratch
            y = acc_ref[jj]
            lg = y[:, 0 * tile_n:1 * tile_n]
            ad = y[:, 1 * tile_n:2 * tile_n]
            bt = y[:, 2 * tile_n:3 * tile_n]
            ml = jnp.max(lg, axis=1, keepdims=True)
            mb = jnp.max(bt, axis=1, keepdims=True)
            sa = jnp.sum(ad, axis=1, keepdims=True)
            m_l = ml if m_l is None else jnp.maximum(m_l, ml)
            m_b = mb if m_b is None else jnp.maximum(m_b, mb)
            a_sum = sa if a_sum is None else a_sum + sa

        # Pass 2: sum(exp(x - max)) per head.
        s_l = s_b = None
        for jj in range(n_tiles):
            y = acc_ref[jj]
            el = jnp.sum(jnp.exp(y[:, 0 * tile_n:1 * tile_n] - m_l),
                         axis=1, keepdims=True)
            eb = jnp.sum(jnp.exp(y[:, 2 * tile_n:3 * tile_n] - m_b),
                         axis=1, keepdims=True)
            s_l = el if s_l is None else s_l + el
            s_b = eb if s_b is None else s_b + eb
        lse_l = m_l + jnp.log(s_l)
        lse_b = m_b + jnp.log(s_b)
        corr_q = v_col - a_sum * (1.0 / n_items)

        # Pass 3: write the five lane-dense outputs tile by tile (static,
        # 128-aligned slices -> unmasked vst).
        od = logits_ref.dtype
        for jj in range(n_tiles):
            y = acc_ref[jj]
            lg = y[:, 0 * tile_n:1 * tile_n]
            ad = y[:, 1 * tile_n:2 * tile_n]
            bt = y[:, 2 * tile_n:3 * tile_n]
            sl = slice(jj * tile_n, (jj + 1) * tile_n)
            logits_ref[:, sl] = lg.astype(od)
            logp_ref[:, sl] = (lg - lse_l).astype(od)
            beta_ref[:, sl] = bt.astype(od)
            beta_logp_ref[:, sl] = (bt - lse_b).astype(od)
            q_ref[:, sl] = (ad + corr_q).astype(od)


# ---------------------------------------------------------------------------
# Parameter packing.
# ---------------------------------------------------------------------------
def _pack_fused(params, item_num, n_pad, compute_dtype):
    """Fused weight (H, 3*Np + 128): [logits | adv | beta | v in lane 0]."""
    pad = n_pad - item_num

    def pad_w(w):
        return jnp.pad(w, ((0, 0), (0, pad)))

    v_slot_w = jnp.pad(params["v_w"], ((0, 0), (0, 127)))  # lane 0 = v, rest 0
    w_fused = jnp.concatenate(
        [pad_w(params["logits_w"]), pad_w(params["adv_w"]),
         pad_w(params["beta_w"]), v_slot_w], axis=1).astype(compute_dtype)

    mask_pad = jnp.full((1, pad), _NEG_INF, jnp.float32)
    zero_pad = jnp.zeros((1, pad), jnp.float32)
    v_slot_b = jnp.pad(params["v_b"], ((0, 0), (0, 127)))
    b_fused = jnp.concatenate(
        [params["logits_b"], mask_pad,   # padded logits -> -1e30 (softmax-safe)
         params["adv_b"], zero_pad,      # padded adv -> 0 (sum unaffected)
         params["beta_b"], mask_pad,
         v_slot_b], axis=1).astype(jnp.float32)  # bias/softmax math stays f32
    return w_fused, b_fused


def _pack_ntiled(params, item_num, n_pad, tile_n, compute_dtype):
    """Per-item-tile interleaved weight (H, 3*Np): [... | L_j | A_j | B_j | ...]."""
    pad = n_pad - item_num
    H = params["logits_w"].shape[0]
    n_tiles = n_pad // tile_n

    def pad_w(w):
        return jnp.pad(w, ((0, 0), (0, pad)))

    L = pad_w(params["logits_w"]).reshape(H, n_tiles, tile_n)
    A = pad_w(params["adv_w"]).reshape(H, n_tiles, tile_n)
    Bm = pad_w(params["beta_w"]).reshape(H, n_tiles, tile_n)
    w_nt = jnp.stack([L, A, Bm], axis=2).reshape(H, 3 * n_pad).astype(compute_dtype)

    mask_pad = jnp.full((1, pad), _NEG_INF, jnp.float32)
    zero_pad = jnp.zeros((1, pad), jnp.float32)
    lb = jnp.concatenate([params["logits_b"], mask_pad], axis=1).reshape(1, n_tiles, tile_n)
    ab = jnp.concatenate([params["adv_b"], zero_pad], axis=1).reshape(1, n_tiles, tile_n)
    bb = jnp.concatenate([params["beta_b"], mask_pad], axis=1).reshape(1, n_tiles, tile_n)
    b_nt = jnp.stack([lb, ab, bb], axis=2).reshape(1, 3 * n_pad).astype(jnp.float32)

    wv = jnp.pad(params["v_w"], ((0, 0), (0, 127))).astype(compute_dtype)
    bv = jnp.pad(params["v_b"], ((0, 0), (0, 127))).astype(jnp.float32)
    return w_nt, b_nt, wv, bv


# ---------------------------------------------------------------------------
# Wrapper.
# ---------------------------------------------------------------------------
def _forward(state_hidden, params, *, compute_dtype, out_dtype, tile_b, tile_n,
             single_buffer_resident):
    B, H = state_hidden.shape
    N = params["logits_w"].shape[1]
    n_pad = _round_up(max(N, 128), 128)

    row_align = 16 if jnp.dtype(compute_dtype) == jnp.dtype(jnp.bfloat16) else 8
    if tile_b is None:
        tile_b = min(256, _round_up(B, row_align))
    else:
        tile_b = _round_up(tile_b, row_align)
    b_pad = _round_up(B, tile_b)

    w_isz = jnp.dtype(compute_dtype).itemsize
    o_isz = jnp.dtype(out_dtype).itemsize
    n_res = 1 if single_buffer_resident else 2
    budget = int(_vmem_cap_bytes() * 0.8)

    fused_w_total = 3 * n_pad + 128
    fused_needed = (n_res * (H * fused_w_total * w_isz + fused_w_total * 4)
                    + 2 * tile_b * H * w_isz
                    + 2 * 5 * tile_b * n_pad * o_isz
                    + tile_b * fused_w_total * 4)
    if tile_n is None:
        use_fused = fused_needed <= budget
        if not use_fused:
            tile_n = next(t for t in (1024, 512, 256, 128) if n_pad % t == 0)
    else:
        tile_n = max(128, _round_up(tile_n, 128))
        while n_pad % tile_n:
            tile_n -= 128
        use_fused = tile_n >= n_pad

    x = state_hidden
    if b_pad != B:
        x = jnp.pad(x, ((0, b_pad - B), (0, 0)))
    if x.dtype != jnp.dtype(compute_dtype):
        x = x.astype(compute_dtype)  # cast once in the wrapper, not per tile

    def resident_spec(shape, index_map):
        # Grid-invariant blocks: single buffer (index never changes).
        if single_buffer_resident:
            return pl.BlockSpec(shape, index_map, pipeline_mode=pl.Buffered(1))
        return pl.BlockSpec(shape, index_map)

    out_shape = tuple(jax.ShapeDtypeStruct((b_pad, n_pad), out_dtype)
                      for _ in range(5))
    # NOTE: if an xprof trace shows exposed output writeback, bump out_specs to
    # pipeline_mode=pl.Buffered(3) and pay for it by reducing tile_b.

    if use_fused:
        w_fused, b_fused = _pack_fused(params, N, n_pad, compute_dtype)
        kernel = functools.partial(_qnet_fused_kernel, n_pad=n_pad, n_items=N)
        out_spec = pl.BlockSpec((tile_b, n_pad), lambda i: (i, 0))
        outs = pl.pallas_call(
            kernel,
            out_shape=out_shape,
            grid_spec=pltpu.PrefetchScalarGridSpec(
                num_scalar_prefetch=0,
                grid=(b_pad // tile_b,),
                in_specs=[
                    pl.BlockSpec((tile_b, H), lambda i: (i, 0)),          # pipelined
                    resident_spec((H, fused_w_total), lambda i: (0, 0)),  # resident
                    resident_spec((1, fused_w_total), lambda i: (0, 0)),  # resident
                ],
                out_specs=[out_spec] * 5,
            ),
            compiler_params=pltpu.CompilerParams(
                dimension_semantics=("parallel",),          # v7x: 2 TCs split batch
                vmem_limit_bytes=_vmem_limit(fused_needed)),
        )(x, w_fused, b_fused)
    else:
        n_tiles = n_pad // tile_n
        w_nt, b_nt, wv, bv = _pack_ntiled(params, N, n_pad, tile_n, compute_dtype)
        kernel = functools.partial(_qnet_ntiled_kernel, tile_n=tile_n,
                                   n_tiles=n_tiles, n_items=N)
        needed = (2 * (H * 3 * tile_n * w_isz + 3 * tile_n * 4)
                  + 2 * tile_b * H * w_isz
                  + n_res * (H * 128 * w_isz + 128 * 4)
                  + n_tiles * tile_b * 3 * tile_n * 4       # raw-head scratch
                  + 2 * 5 * tile_b * n_pad * o_isz
                  + tile_b * 3 * tile_n * 4)
        out_spec = pl.BlockSpec((tile_b, n_pad), lambda i, j: (i, 0))
        outs = pl.pallas_call(
            kernel,
            out_shape=out_shape,
            grid_spec=pltpu.PrefetchScalarGridSpec(
                num_scalar_prefetch=0,
                grid=(b_pad // tile_b, n_tiles),
                in_specs=[
                    pl.BlockSpec((tile_b, H), lambda i, j: (i, 0)),
                    pl.BlockSpec((H, 3 * tile_n), lambda i, j: (0, j)),   # streamed
                    pl.BlockSpec((1, 3 * tile_n), lambda i, j: (0, j)),   # streamed
                    resident_spec((H, 128), lambda i, j: (0, 0)),
                    resident_spec((1, 128), lambda i, j: (0, 0)),
                ],
                out_specs=[out_spec] * 5,
                scratch_shapes=[
                    pltpu.VMEM((n_tiles, tile_b, 3 * tile_n), jnp.float32)],
            ),
            compiler_params=pltpu.CompilerParams(
                dimension_semantics=("parallel", "arbitrary"),
                vmem_limit_bytes=_vmem_limit(needed)),
        )(x, w_nt, b_nt, wv, bv)

    logits, logp, beta, beta_logp, q = outs
    if B != b_pad or N != n_pad:
        logits, logp, beta, beta_logp, q = (
            o[:B, :N] for o in (logits, logp, beta, beta_logp, q))
    # Note: beta_logits uses state_hidden.detach() in torch; forward values are
    # identical (detach only affects autograd).
    return logits, logp, beta, beta_logp, q


def qnetwork_forward(state_hidden, params, *, compute_dtype=jnp.bfloat16,
                     out_dtype=jnp.float32, tile_b=None, tile_n=None):
    """state_hidden: (B, H). Returns (logits, log_softmax(logits), beta_logits,
    log_softmax(beta_logits), q_values) exactly as QNetwork.forward."""
    try:
        return _forward(state_hidden, params, compute_dtype=compute_dtype,
                        out_dtype=out_dtype, tile_b=tile_b, tile_n=tile_n,
                        single_buffer_resident=True)
    except Exception:
        # pl.Buffered pipeline hint not accepted by this jax build: retry with
        # default (double-buffered) specs.
        return _forward(state_hidden, params, compute_dtype=compute_dtype,
                        out_dtype=out_dtype, tile_b=tile_b, tile_n=tile_n,
                        single_buffer_resident=False)


# ---------------------------------------------------------------------------
# Init / reference.
# ---------------------------------------------------------------------------
def _xavier_normal(key, fan_in, fan_out):
    std = (2.0 / (fan_in + fan_out)) ** 0.5
    return std * jax.random.normal(key, (fan_in, fan_out), dtype=jnp.float32)


def init_params(key, hidden_size, item_num):
    k1, k2, k3, k4 = jax.random.split(key, 4)
    return {
        # nn.Linear heads: xavier_normal_ weights, zero biases
        "logits_w": _xavier_normal(k1, hidden_size, item_num),
        "logits_b": jnp.zeros((1, item_num), jnp.float32),
        "adv_w": _xavier_normal(k2, hidden_size, item_num),
        "adv_b": jnp.zeros((1, item_num), jnp.float32),
        "beta_w": _xavier_normal(k3, hidden_size, item_num),
        "beta_b": jnp.zeros((1, item_num), jnp.float32),
        "v_w": _xavier_normal(k4, hidden_size, 1),
        "v_b": jnp.zeros((1, 1), jnp.float32),
    }
    # TODO(synk): state_encoder (nn.Embedding tables + external rsmodel.GRU
    # head), the learned loss-weight Parameter and the Adam optimizer are not
    # part of forward(); only forward() is implemented here.


def _reference(state_hidden, p):
    logits = state_hidden @ p["logits_w"] + p["logits_b"]
    adv = state_hidden @ p["adv_w"] + p["adv_b"]
    beta = state_hidden @ p["beta_w"] + p["beta_b"]
    v = state_hidden @ p["v_w"] + p["v_b"]
    q = v + adv - jnp.mean(adv, axis=1, keepdims=True)
    return (logits, jax.nn.log_softmax(logits, axis=1),
            beta, jax.nn.log_softmax(beta, axis=1), q)


if __name__ == "__main__":
    key = jax.random.PRNGKey(0)

    # --- Case 1: fused single-pass path ------------------------------------
    B, hidden_size, item_num = 8, 32, 64
    k_params, k_h = jax.random.split(key)
    params = init_params(k_params, hidden_size, item_num)
    state_hidden = jax.random.normal(k_h, (B, hidden_size), dtype=jnp.float32)
    refs = _reference(state_hidden, params)

    # f32 matmul path (near-exact vs reference).
    outs = jax.block_until_ready(
        qnetwork_forward(state_hidden, params, compute_dtype=jnp.float32))
    for o, r in zip(outs, refs):
        assert o.shape == r.shape
        assert jnp.allclose(o, r, atol=1e-4, rtol=1e-4)

    # default bf16 weight/activation matmul (f32 accumulate + f32 softmax/q).
    outs_bf16 = jax.block_until_ready(qnetwork_forward(state_hidden, params))
    for o, r in zip(outs_bf16, refs):
        assert o.shape == r.shape
        assert jnp.allclose(o, r, atol=5e-2, rtol=5e-2)

    # --- Case 2: N-tiled weight-streaming path (forced with small tile_n) ---
    B2, H2, N2 = 35, 32, 200   # odd batch + non-128-multiple item_num
    k_p2, k_h2 = jax.random.split(k_h)
    params2 = init_params(k_p2, H2, N2)
    sh2 = jax.random.normal(k_h2, (B2, H2), dtype=jnp.float32)
    refs2 = _reference(sh2, params2)
    outs2 = jax.block_until_ready(
        qnetwork_forward(sh2, params2, compute_dtype=jnp.float32, tile_n=128))
    for o, r in zip(outs2, refs2):
        assert o.shape == r.shape
        assert jnp.allclose(o, r, atol=1e-4, rtol=1e-4)

    print("KERNEL_OK")
</pallas_src>

<mosaic_0001>
module attributes {stable_mosaic.version = 11 : i64} {
  func.func @_qnet_fused_kernel(%arg0: i32, %arg1: memref<8x32xf32, #tpu.memory_space<vmem>>, %arg2: memref<32x512xf32, #tpu.memory_space<vmem>>, %arg3: memref<1x512xf32, #tpu.memory_space<vmem>>, %arg4: memref<8x128xf32, #tpu.memory_space<vmem>>, %arg5: memref<8x128xf32, #tpu.memory_space<vmem>>, %arg6: memref<8x128xf32, #tpu.memory_space<vmem>>, %arg7: memref<8x128xf32, #tpu.memory_space<vmem>>, %arg8: memref<8x128xf32, #tpu.memory_space<vmem>>) attributes {dimension_semantics = [#tpu.dimension_semantics<parallel>], iteration_bounds = array<i64: 1>, scalar_prefetch = 0 : i64, scratch_operands = 0 : i64, tpu.core_type = #tpu.core_type<tc>, window_params = [{transform_indices = @transform_0, window_bounds = array<i64: 8, 32>}, {pipeline_mode = #tpu.pipeline_mode<synchronous>, transform_indices = @transform_1, window_bounds = array<i64: 32, 512>}, {pipeline_mode = #tpu.pipeline_mode<synchronous>, transform_indices = @transform_2, window_bounds = array<i64: 1, 512>}, {transform_indices = @transform_3, window_bounds = array<i64: 8, 128>}, {transform_indices = @transform_4, window_bounds = array<i64: 8, 128>}, {transform_indices = @transform_5, window_bounds = array<i64: 8, 128>}, {transform_indices = @transform_6, window_bounds = array<i64: 8, 128>}, {transform_indices = @transform_7, window_bounds = array<i64: 8, 128>}]} {
    %c0 = arith.constant 0 : index
    %c0_0 = arith.constant 0 : index
    %0 = vector.load %arg1[%c0, %c0_0] : memref<8x32xf32, #tpu.memory_space<vmem>>, vector<8x32xf32>
    %c0_1 = arith.constant 0 : index
    %c0_2 = arith.constant 0 : index
    %1 = vector.load %arg2[%c0_1, %c0_2] : memref<32x512xf32, #tpu.memory_space<vmem>>, vector<32x512xf32>
    %cst = arith.constant dense<0.000000e+00> : vector<8x512xf32>
    %2 = tpu.matmul %0, %1, %cst {dimension_numbers = #tpu.dot_dimension_numbers<[1], [0], [0], [1], [0, 0, 1, 1], [], []>} : vector<8x32xf32>, vector<32x512xf32>, vector<8x512xf32> -> vector<8x512xf32>
    %c0_3 = arith.constant 0 : index
    %c0_4 = arith.constant 0 : index
    %3 = vector.load %arg3[%c0_3, %c0_4] : memref<1x512xf32, #tpu.memory_space<vmem>>, vector<1x512xf32>
    %4 = vector.broadcast %3 : vector<1x512xf32> to vector<8x512xf32>
    %5 = arith.addf %2, %4 : vector<8x512xf32>
    %6 = vector.extract_strided_slice %5 {offsets = [0, 0], sizes = [8, 128], strides = [1, 1]} : vector<8x512xf32> to vector<8x128xf32>
    %7 = vector.extract_strided_slice %5 {offsets = [0, 128], sizes = [8, 128], strides = [1, 1]} : vector<8x512xf32> to vector<8x128xf32>
    %8 = vector.extract_strided_slice %5 {offsets = [0, 256], sizes = [8, 128], strides = [1, 1]} : vector<8x512xf32> to vector<8x128xf32>
    %9 = vector.extract_strided_slice %5 {offsets = [0, 384], sizes = [8, 128], strides = [1, 1]} : vector<8x512xf32> to vector<8x128xf32>
    %cst_5 = arith.constant dense<0.000000e+00> : vector<8xf32>
    %10 = vector.multi_reduction <add>, %9, %cst_5 [1] : vector<8x128xf32> to vector<8xf32>
    %11 = vector.shape_cast %10 : vector<8xf32> to vector<8x1xf32>
    %cst_6 = arith.constant dense<0.000000e+00> : vector<8xf32>
    %12 = vector.multi_reduction <add>, %7, %cst_6 [1] : vector<8x128xf32> to vector<8xf32>
    %13 = vector.shape_cast %12 : vector<8xf32> to vector<8x1xf32>
    %cst_7 = arith.constant 1.562500e-02 : f32
    %14 = vector.broadcast %cst_7 : f32 to vector<8x1xf32>
    %15 = arith.mulf %13, %14 : vector<8x1xf32>
    %16 = arith.subf %11, %15 : vector<8x1xf32>
    %17 = vector.broadcast %16 : vector<8x1xf32> to vector<8x128xf32>
    %18 = arith.addf %7, %17 : vector<8x128xf32>
    %c0_8 = arith.constant 0 : index
    %c0_9 = arith.constant 0 : index
    %19 = vector.load %arg4[%c0_8, %c0_9] : memref<8x128xf32, #tpu.memory_space<vmem>>, vector<8x128xf32>
    tpu.vector_store %arg4[%c0_8, %c0_9], %6 {strides = array<i32>} : memref<8x128xf32, #tpu.memory_space<vmem>>, vector<8x128xf32>,
    %cst_10 = arith.constant dense<0xFF800000> : vector<8xf32>
    %20 = vector.multi_reduction <maximumf>, %6, %cst_10 [1] : vector<8x128xf32> to vector<8xf32>
    %21 = vector.shape_cast %20 : vector<8xf32> to vector<8x1xf32>
    %22 = vector.broadcast %21 : vector<8x1xf32> to vector<8x128xf32>
    %23 = arith.subf %6, %22 : vector<8x128xf32>
    %24 = math.exp %23 : vector<8x128xf32>
    %cst_11 = arith.constant dense<0.000000e+00> : vector<8xf32>
    %25 = vector.multi_reduction <add>, %24, %cst_11 [1] : vector<8x128xf32> to vector<8xf32>
    %26 = vector.shape_cast %25 : vector<8xf32> to vector<8x1xf32>
    %27 = math.log %26 : vector<8x1xf32>
    %28 = vector.broadcast %27 : vector<8x1xf32> to vector<8x128xf32>
    %29 = arith.subf %23, %28 : vector<8x128xf32>
    %c0_12 = arith.constant 0 : index
    %c0_13 = arith.constant 0 : index
    %30 = vector.load %arg5[%c0_12, %c0_13] : memref<8x128xf32, #tpu.memory_space<vmem>>, vector<8x128xf32>
    tpu.vector_store %arg5[%c0_12, %c0_13], %29 {strides = array<i32>} : memref<8x128xf32, #tpu.memory_space<vmem>>, vector<8x128xf32>,
    %c0_14 = arith.constant 0 : index
    %c0_15 = arith.constant 0 : index
    %31 = vector.load %arg6[%c0_14, %c0_15] : memref<8x128xf32, #tpu.memory_space<vmem>>, vector<8x128xf32>
    tpu.vector_store %arg6[%c0_14, %c0_15], %8 {strides = array<i32>} : memref<8x128xf32, #tpu.memory_space<vmem>>, vector<8x128xf32>,
    %cst_16 = arith.constant dense<0xFF800000> : vector<8xf32>
    %32 = vector.multi_reduction <maximumf>, %8, %cst_16 [1] : vector<8x128xf32> to vector<8xf32>
    %33 = vector.shape_cast %32 : vector<8xf32> to vector<8x1xf32>
    %34 = vector.broadcast %33 : vector<8x1xf32> to vector<8x128xf32>
    %35 = arith.subf %8, %34 : vector<8x128xf32>
    %36 = math.exp %35 : vector<8x128xf32>
    %cst_17 = arith.constant dense<0.000000e+00> : vector<8xf32>
    %37 = vector.multi_reduction <add>, %36, %cst_17 [1] : vector<8x128xf32> to vector<8xf32>
    %38 = vector.shape_cast %37 : vector<8xf32> to vector<8x1xf32>
    %39 = math.log %38 : vector<8x1xf32>
    %40 = vector.broadcast %39 : vector<8x1xf32> to vector<8x128xf32>
    %41 = arith.subf %35, %40 : vector<8x128xf32>
    %c0_18 = arith.constant 0 : index
    %c0_19 = arith.constant 0 : index
    %42 = vector.load %arg7[%c0_18, %c0_19] : memref<8x128xf32, #tpu.memory_space<vmem>>, vector<8x128xf32>
    tpu.vector_store %arg7[%c0_18, %c0_19], %41 {strides = array<i32>} : memref<8x128xf32, #tpu.memory_space<vmem>>, vector<8x128xf32>,
    %c0_20 = arith.constant 0 : index
    %c0_21 = arith.constant 0 : index
    %43 = vector.load %arg8[%c0_20, %c0_21] : memref<8x128xf32, #tpu.memory_space<vmem>>, vector<8x128xf32>
    tpu.vector_store %arg8[%c0_20, %c0_21], %18 {strides = array<i32>} : memref<8x128xf32, #tpu.memory_space<vmem>>, vector<8x128xf32>,
    return
  }
  func.func @transform_0(%arg0: i32) -> (i32, i32) {
    %c0_i32 = arith.constant 0 : i32
    %c0_i32_0 = arith.constant 0 : i32
    return %arg0, %c0_i32 : i32, i32
  }
  func.func @transform_1(%arg0: i32) -> (i32, i32) {
    %c0_i32 = arith.constant 0 : i32
    %c0_i32_0 = arith.constant 0 : i32
    %c0_i32_1 = arith.constant 0 : i32
    return %c0_i32, %c0_i32_0 : i32, i32
  }
  func.func @transform_2(%arg0: i32) -> (i32, i32) {
    %c0_i32 = arith.constant 0 : i32
    %c0_i32_0 = arith.constant 0 : i32
    %c0_i32_1 = arith.constant 0 : i32
    return %c0_i32, %c0_i32_0 : i32, i32
  }
  func.func @transform_3(%arg0: i32) -> (i32, i32) {
    %c0_i32 = arith.constant 0 : i32
    %c0_i32_0 = arith.constant 0 : i32
    return %arg0, %c0_i32 : i32, i32
  }
  func.func @transform_4(%arg0: i32) -> (i32, i32) {
    %c0_i32 = arith.constant 0 : i32
    %c0_i32_0 = arith.constant 0 : i32
    return %arg0, %c0_i32 : i32, i32
  }
  func.func @transform_5(%arg0: i32) -> (i32, i32) {
    %c0_i32 = arith.constant 0 : i32
    %c0_i32_0 = arith.constant 0 : i32
    return %arg0, %c0_i32 : i32, i32
  }
  func.func @transform_6(%arg0: i32) -> (i32, i32) {
    %c0_i32 = arith.constant 0 : i32
    %c0_i32_0 = arith.constant 0 : i32
    return %arg0, %c0_i32 : i32, i32
  }
  func.func @transform_7(%arg0: i32) -> (i32, i32) {
    %c0_i32 = arith.constant 0 : i32
    %c0_i32_0 = arith.constant 0 : i32
    return %arg0, %c0_i32 : i32, i32
  }
}

module attributes {stable_mosaic.version = 11 : i64} {
  func.func @_qnet_fused_kernel(%arg0: i32, %arg1: memref<8x32xf32, #tpu.memory_space<vmem>>, %arg2: memref<32x512xf32, #tpu.memory_space<vmem>>, %arg3: memref<1x512xf32, #tpu.memory_space<vmem>>, %arg4: memref<8x128xf32, #tpu.memory_space<vmem>>, %arg5: memref<8x128xf32, #tpu.memory_space<vmem>>, %arg6: memref<8x128xf32, #tpu.memory_space<vmem>>, %arg7: memref<8x128xf32, #tpu.memory_space<vmem>>, %arg8: memref<8x128xf32, #tpu.memory_space<vmem>>) attributes {dimension_semantics = [#tpu.dimension_semantics<parallel>], iteration_bounds = array<i64: 1>, scalar_prefetch = 0 : i64, scratch_operands = 0 : i64, tpu.core_type = #tpu.core_type<tc>, window_params = [{transform_indices = @transform_0, window_bounds = array<i64: 8, 32>}, {pipeline_mode = #tpu.pipeline_mode<synchronous>, transform_indices = @transform_1, window_bounds = array<i64: 32, 512>}, {pipeline_mode = #tpu.pipeline_mode<synchronous>, transform_indices = @transform_2, window_bounds = array<i64: 1, 512>}, {transform_indices = @transform_3, window_bounds = array<i64: 8, 128>}, {transform_indices = @transform_4, window_bounds = array<i64: 8, 128>}, {transform_indices = @transform_5, window_bounds = array<i64: 8, 128>}, {transform_indices = @transform_6, window_bounds = array<i64: 8, 128>}, {transform_indices = @transform_7, window_bounds = array<i64: 8, 128>}]} {
    %c0 = arith.constant 0 : index
    %c0_0 = arith.constant 0 : index
    %0 = vector.load %arg1[%c0, %c0_0] : memref<8x32xf32, #tpu.memory_space<vmem>>, vector<8x32xf32>
    %c0_1 = arith.constant 0 : index
    %c0_2 = arith.constant 0 : index
    %1 = vector.load %arg2[%c0_1, %c0_2] : memref<32x512xf32, #tpu.memory_space<vmem>>, vector<32x512xf32>
    %cst = arith.constant dense<0.000000e+00> : vector<8x512xf32>
    %2 = tpu.matmul %0, %1, %cst {dimension_numbers = #tpu.dot_dimension_numbers<[1], [0], [0], [1], [0, 0, 1, 1], [], []>} : vector<8x32xf32>, vector<32x512xf32>, vector<8x512xf32> -> vector<8x512xf32>
    %c0_3 = arith.constant 0 : index
    %c0_4 = arith.constant 0 : index
    %3 = vector.load %arg3[%c0_3, %c0_4] : memref<1x512xf32, #tpu.memory_space<vmem>>, vector<1x512xf32>
    %4 = vector.broadcast %3 : vector<1x512xf32> to vector<8x512xf32>
    %5 = arith.addf %2, %4 : vector<8x512xf32>
    %6 = vector.extract_strided_slice %5 {offsets = [0, 0], sizes = [8, 128], strides = [1, 1]} : vector<8x512xf32> to vector<8x128xf32>
    %7 = vector.extract_strided_slice %5 {offsets = [0, 128], sizes = [8, 128], strides = [1, 1]} : vector<8x512xf32> to vector<8x128xf32>
    %8 = vector.extract_strided_slice %5 {offsets = [0, 256], sizes = [8, 128], strides = [1, 1]} : vector<8x512xf32> to vector<8x128xf32>
    %9 = vector.extract_strided_slice %5 {offsets = [0, 384], sizes = [8, 128], strides = [1, 1]} : vector<8x512xf32> to vector<8x128xf32>
    %cst_5 = arith.constant dense<0.000000e+00> : vector<8xf32>
    %10 = vector.multi_reduction <add>, %9, %cst_5 [1] : vector<8x128xf32> to vector<8xf32>
    %11 = vector.shape_cast %10 : vector<8xf32> to vector<8x1xf32>
    %cst_6 = arith.constant dense<0.000000e+00> : vector<8xf32>
    %12 = vector.multi_reduction <add>, %7, %cst_6 [1] : vector<8x128xf32> to vector<8xf32>
    %13 = vector.shape_cast %12 : vector<8xf32> to vector<8x1xf32>
    %cst_7 = arith.constant 1.562500e-02 : f32
    %14 = vector.broadcast %cst_7 : f32 to vector<8x1xf32>
    %15 = arith.mulf %13, %14 : vector<8x1xf32>
    %16 = arith.subf %11, %15 : vector<8x1xf32>
    %17 = vector.broadcast %16 : vector<8x1xf32> to vector<8x128xf32>
    %18 = arith.addf %7, %17 : vector<8x128xf32>
    %c0_8 = arith.constant 0 : index
    %c0_9 = arith.constant 0 : index
    %19 = vector.load %arg4[%c0_8, %c0_9] : memref<8x128xf32, #tpu.memory_space<vmem>>, vector<8x128xf32>
    tpu.vector_store %arg4[%c0_8, %c0_9], %6 {strides = array<i32>} : memref<8x128xf32, #tpu.memory_space<vmem>>, vector<8x128xf32>,
    %cst_10 = arith.constant dense<0xFF800000> : vector<8xf32>
    %20 = vector.multi_reduction <maximumf>, %6, %cst_10 [1] : vector<8x128xf32> to vector<8xf32>
    %21 = vector.shape_cast %20 : vector<8xf32> to vector<8x1xf32>
    %22 = vector.broadcast %21 : vector<8x1xf32> to vector<8x128xf32>
    %23 = arith.subf %6, %22 : vector<8x128xf32>
    %24 = math.exp %23 : vector<8x128xf32>
    %cst_11 = arith.constant dense<0.000000e+00> : vector<8xf32>
    %25 = vector.multi_reduction <add>, %24, %cst_11 [1] : vector<8x128xf32> to vector<8xf32>
    %26 = vector.shape_cast %25 : vector<8xf32> to vector<8x1xf32>
    %27 = math.log %26 : vector<8x1xf32>
    %28 = vector.broadcast %27 : vector<8x1xf32> to vector<8x128xf32>
    %29 = arith.subf %23, %28 : vector<8x128xf32>
    %c0_12 = arith.constant 0 : index
    %c0_13 = arith.constant 0 : index
    %30 = vector.load %arg5[%c0_12, %c0_13] : memref<8x128xf32, #tpu.memory_space<vmem>>, vector<8x128xf32>
    tpu.vector_store %arg5[%c0_12, %c0_13], %29 {strides = array<i32>} : memref<8x128xf32, #tpu.memory_space<vmem>>, vector<8x128xf32>,
    %c0_14 = arith.constant 0 : index
    %c0_15 = arith.constant 0 : index
    %31 = vector.load %arg6[%c0_14, %c0_15] : memref<8x128xf32, #tpu.memory_space<vmem>>, vector<8x128xf32>
    tpu.vector_store %arg6[%c0_14, %c0_15], %8 {strides = array<i32>} : memref<8x128xf32, #tpu.memory_space<vmem>>, vector<8x128xf32>,
    %cst_16 = arith.constant dense<0xFF800000> : vector<8xf32>
    %32 = vector.multi_reduction <maximumf>, %8, %cst_16 [1] : vector<8x128xf32> to vector<8xf32>
    %33 = vector.shape_cast %32 : vector<8xf32> to vector<8x1xf32>
    %34 = vector.broadcast %33 : vector<8x1xf32> to vector<8x128xf32>
    %35 = arith.subf %8, %34 : vector<8x128xf32>
    %36 = math.exp %35 : vector<8x128xf32>
    %cst_17 = arith.constant dense<0.000000e+00> : vector<8xf32>
    %37 = vector.multi_reduction <add>, %36, %cst_17 [1] : vector<8x128xf32> to vector<8xf32>
    %38 = vector.shape_cast %37 : vector<8xf32> to vector<8x1xf32>
    %39 = math.log %38 : vector<8x1xf32>
    %40 = vector.broadcast %39 : vector<8x1xf32> to vector<8x128xf32>
    %41 = arith.subf %35, %40 : vector<8x128xf32>
    %c0_18 = arith.constant 0 : index
    %c0_19 = arith.constant 0 : index
    %42 = vector.load %arg7[%c0_18, %c0_19] : memref<8x128xf32, #tpu.memory_space<vmem>>, vector<8x128xf32>
    tpu.vector_store %arg7[%c0_18, %c0_19], %41 {strides = array<i32>} : memref<8x128xf32, #tpu.memory_space<vmem>>, vector<8x128xf32>,
    %c0_20 = arith.constant 0 : index
    %c0_21 = arith.constant 0 : index
    %43 = vector.load %arg8[%c0_20, %c0_21] : memref<8x128xf32, #tpu.memory_space<vmem>>, vector<8x128xf32>
    tpu.vector_store %arg8[%c0_20, %c0_21], %18 {strides = array<i32>} : memref<8x128xf32, #tpu.memory_space<vmem>>, vector<8x128xf32>,
    return
  }
  func.func @transform_0(%arg0: i32) -> (i32, i32) {
    %c0_i32 = arith.constant 0 : i32
    %c0_i32_0 = arith.constant 0 : i32
    return %arg0, %c0_i32 : i32, i32
  }
  func.func @transform_1(%arg0: i32) -> (i32, i32) {
    %c0_i32 = arith.constant 0 : i32
    %c0_i32_0 = arith.constant 0 : i32
    %c0_i32_1 = arith.constant 0 : i32
    return %c0_i32, %c0_i32_0 : i32, i32
  }
  func.func @transform_2(%arg0: i32) -> (i32, i32) {
    %c0_i32 = arith.constant 0 : i32
    %c0_i32_0 = arith.constant 0 : i32
    %c0_i32_1 = arith.constant 0 : i32
    return %c0_i32, %c0_i32_0 : i32, i32
  }
  func.func @transform_3(%arg0: i32) -> (i32, i32) {
    %c0_i32 = arith.constant 0 : i32
    %c0_i32_0 = arith.constant 0 : i32
    return %arg0, %c0_i32 : i32, i32
  }
  func.func @transform_4(%arg0: i32) -> (i32, i32) {
    %c0_i32 = arith.constant 0 : i32
    %c0_i32_0 = arith.constant 0 : i32
    return %arg0, %c0_i32 : i32, i32
  }
  func.func @transform_5(%arg0: i32) -> (i32, i32) {
    %c0_i32 = arith.constant 0 : i32
    %c0_i32_0 = arith.constant 0 : i32
    return %arg0, %c0_i32 : i32, i32
  }
  func.func @transform_6(%arg0: i32) -> (i32, i32) {
    %c0_i32 = arith.constant 0 : i32
    %c0_i32_0 = arith.constant 0 : i32
    return %arg0, %c0_i32 : i32, i32
  }
  func.func @transform_7(%arg0: i32) -> (i32, i32) {
    %c0_i32 = arith.constant 0 : i32
    %c0_i32_0 = arith.constant 0 : i32
    return %arg0, %c0_i32 : i32, i32
  }
}

</mosaic_0001>

<llo_original>
// kernel: tpu_custom_call.1
$region0: #{tpu_custom_call.1}
  #allocation0 [shape = 'u32[]', space=smem, size = 0x4, offset = 0x4, fixed_abs, tag = 'smem constant byte address 0x4 - core index']
  #allocation1 [shape = 'u32[144,128]{1,0:T(1,128)}', space=vmem, size = 0x12000, scoped, tag = 'internal scratch']
  %s0 = inlined_call_operand.hbm [shape: f32[8,32], index: 0, kind: input, shape index: {}]
  %s1 = inlined_call_operand.hbm [shape: f32[32,512], index: 1, kind: input, shape index: {}]
  %s2 = inlined_call_operand.hbm [shape: f32[1,512], index: 2, kind: input, shape index: {}]
  %s3 = inlined_call_operand.hbm [shape: f32[8,128], index: 3, kind: output, shape index: {0}]
  %s4 = inlined_call_operand.hbm [shape: f32[8,128], index: 4, kind: output, shape index: {1}]
  %s5 = inlined_call_operand.hbm [shape: f32[8,128], index: 5, kind: output, shape index: {2}]
  %s6 = inlined_call_operand.hbm [shape: f32[8,128], index: 6, kind: output, shape index: {3}]
  %s7 = inlined_call_operand.hbm [shape: f32[8,128], index: 7, kind: output, shape index: {4}]
  %8 = xla_tuple %s3, %s4, %s5, %s6, %s7
  %s9 = sld [smem:[#allocation0]]
  $region66: #{tpu_custom_call.1} parent=0
    _
  %s11 = ssub.s32 1, %s9
  %s12 = scalar_select 0, %s11, %s9
  $region1: #{tpu_custom_call.1} parent=0
    #allocation2 [shape = 'u8[4096]{0}', space=vmem, size = 0x1000, scoped, tag = 'input window, operand 0, single buffered']
    #allocation3 [shape = 's32[1]{0}', space=sflag, size = 0x4, scoped, tag = 'scoped memory for tpu_custom_call.1']
    #allocation4 [shape = 's32[1]{0}', space=sflag, size = 0x4, scoped, tag = 'scoped memory for tpu_custom_call.1']
    #allocation5 [shape = 'u8[65536]{0}', space=vmem, size = 0x10000, scoped, tag = 'input window, operand 1, single buffered']
    #allocation6 [shape = 's32[1]{0}', space=sflag, size = 0x4, scoped, tag = 'scoped memory for tpu_custom_call.1']
    #allocation7 [shape = 'u8[2048]{0}', space=vmem, size = 0x800, scoped, tag = 'input window, operand 2, single buffered']
    #allocation8 [shape = 'u8[4096]{0}', space=vmem, size = 0x1000, scoped, tag = 'output window, operand 0, single buffered']
    #allocation9 [shape = 'u8[4096]{0}', space=vmem, size = 0x1000, scoped, tag = 'output window, operand 1, single buffered']
    #allocation10 [shape = 's32[1]{0}', space=sflag, size = 0x4, scoped, tag = 'scoped memory for tpu_custom_call.1']
    #allocation11 [shape = 'u8[4096]{0}', space=vmem, size = 0x1000, scoped, tag = 'output window, operand 2, single buffered']
    #allocation12 [shape = 'u8[4096]{0}', space=vmem, size = 0x1000, scoped, tag = 'output window, operand 3, single buffered']
    #allocation13 [shape = 's32[1]{0}', space=sflag, size = 0x4, scoped, tag = 'scoped memory for tpu_custom_call.1']
    #allocation14 [shape = 'u8[4096]{0}', space=vmem, size = 0x1000, scoped, tag = 'output window, operand 4, single buffered']
    %13 = vsyncpa [#allocation3], 0
    %14 = vsyncpa [#allocation6], 0
    %15 = vsyncpa [#allocation4], 0
    %16 = vsyncpa [#allocation10], 0
    %17 = vsyncpa [#allocation13], 0
    // Predicated region
    $region2: #{tpu_custom_call.1} parent=1 // pred_check
      _
    $region3: #{tpu_custom_call.1} parent=1 // pred_check_branch
      %19 = sbr.rel (0) target = $region5
    $region4: #{tpu_custom_call.1} parent=1 // pred_region
      %s21 = ssub.s32 128, 128
      %22 = vsyncadd [#allocation3], %s21
      %s24 = sshll.u32 [#allocation2], 4
      %s25 = int_to_ptr.vmem [resolvable:$true] %s24
      %27 = dma.hbm_to_vmem [thread:$0]  %s0, 128, %s25, [#allocation3]
    $region5: #{tpu_custom_call.1} parent=1 // pred_fallthru
      _
    // Predicated region
    $region6: #{tpu_custom_call.1} parent=1 // pred_check
      _
    $region7: #{tpu_custom_call.1} parent=1 // pred_check_branch
      %29 = sbr.rel (0) target = $region9
    $region8: #{tpu_custom_call.1} parent=1 // pred_region
      %s31 = ssub.s32 2048, 2048
      %32 = vsyncadd [#allocation6], %s31
      %s33 = sshll.u32 [#allocation5], 4
      %s34 = int_to_ptr.vmem [resolvable:$true] %s33
      %39 = dma.hbm_to_vmem [thread:$0]  %s1, 2048, %s34, [#allocation6], 512, 512, 32
    $region9: #{tpu_custom_call.1} parent=1 // pred_fallthru
      _
    // Predicated region
    $region10: #{tpu_custom_call.1} parent=1 // pred_check
      _
    $region11: #{tpu_custom_call.1} parent=1 // pred_check_branch
      %41 = sbr.rel (0) target = $region13
    $region12: #{tpu_custom_call.1} parent=1 // pred_region
      %s43 = ssub.s32 64, 64
      %44 = vsyncadd [#allocation6], %s43
      %s46 = sshll.u32 [#allocation7], 4
      %s47 = int_to_ptr.vmem [resolvable:$true] %s46
      %49 = dma.hbm_to_vmem [thread:$0]  %s2, 64, %s47, [#allocation6]
    $region13: #{tpu_custom_call.1} parent=1 // pred_fallthru
      _
    // Predicated region
    $region14: #{tpu_custom_call.1} parent=1 // pred_check
      _
    $region15: #{tpu_custom_call.1} parent=1 // pred_check_branch
      %51 = sbr.rel (0) target = $region17
    $region16: #{tpu_custom_call.1} parent=1 // pred_region
      %52 = dma.done [#allocation3], 128
    $region17: #{tpu_custom_call.1} parent=1 // pred_fallthru
      _
    // Predicated region
    $region18: #{tpu_custom_call.1} parent=1 // pred_check
      _
    $region19: #{tpu_custom_call.1} parent=1 // pred_check_branch
      %54 = sbr.rel (0) target = $region21
    $region20: #{tpu_custom_call.1} parent=1 // pred_region
      %55 = dma.done [#allocation6], 2048
    $region21: #{tpu_custom_call.1} parent=1 // pred_fallthru
      _
    // Predicated region
    $region22: #{tpu_custom_call.1} parent=1 // pred_check
      _
    $region23: #{tpu_custom_call.1} parent=1 // pred_check_branch
      %57 = sbr.rel (0) target = $region25
    $region24: #{tpu_custom_call.1} parent=1 // pred_region
      %58 = dma.done [#allocation6], 64
    $region25: #{tpu_custom_call.1} parent=1 // pred_fallthru
      _
    %v59 = vld [vmem:[#allocation2] sm:$0xff]
    %v60 = vld [vmem:[#allocation5] sm:$0xff]
    %v61 = vld [vmem:[#allocation5 + $0x8] sm:$0xff]
    %v62 = vld [vmem:[#allocation5 + $0x10] sm:$0xff]
    %v63 = vld [vmem:[#allocation5 + $0x18] sm:$0xff]
    %v64 = vld [vmem:[#allocation5 + $0x20] sm:$0xff]
    %v65 = vld [vmem:[#allocation5 + $0x28] sm:$0xff]
    %v66 = vld [vmem:[#allocation5 + $0x30] sm:$0xff]
    %v67 = vld [vmem:[#allocation5 + $0x38] sm:$0xff]
    %v68 = vld [vmem:[#allocation5 + $0x40] sm:$0xff]
    %v69 = vld [vmem:[#allocation5 + $0x48] sm:$0xff]
    %v70 = vld [vmem:[#allocation5 + $0x50] sm:$0xff]
    %v71 = vld [vmem:[#allocation5 + $0x58] sm:$0xff]
    %v72 = vld [vmem:[#allocation5 + $0x60] sm:$0xff]
    %v73 = vld [vmem:[#allocation5 + $0x68] sm:$0xff]
    %v74 = vld [vmem:[#allocation5 + $0x70] sm:$0xff]
    %v75 = vld [vmem:[#allocation5 + $0x78] sm:$0xff]
    %v76 = vld [vmem:[#allocation7] sm:$0xf]
    %v78 = vlaneseq
    %v79 = vshrl.u32 %v78, 7
    %v80 = vsub.s32 0, %v79
    %v81 = vrot.slane %v76, %v80
    %v82 = vlaneseq
    %v83 = vshrl.u32 %v82, 7
    %v84 = vsub.s32 1, %v83
    %v85 = vrot.slane %v76, %v84
    %v86 = vlaneseq
    %v87 = vshrl.u32 %v86, 7
    %v88 = vsub.s32 2, %v87
    %v89 = vrot.slane %v76, %v88
    %v90 = vlaneseq
    %v91 = vshrl.u32 %v90, 7
    %v92 = vsub.s32 3, %v91
    %v93 = vrot.slane %v76, %v92
    %vm98 = vcmask 261120
    %v100 = vsel %vm98, %v59, 0
    %102 = vmatprep.subr.mxu0 0.0
    %103 = vmatpush1.msra.mxu0 0.0
    %104 = vmatprep.subr.mxu0 0.0
    %105 = vmatpush1.msra.mxu0 0.0
    %106 = vmatprep.subr.mxu0 0.0
    %107 = vmatpush1.msra.mxu0 0.0
    %108 = vmatprep.subr.mxu0 0.0
    %109 = vmatpush1.msra.mxu0 0.0
    %110 = vmatprep.subr.mxu0 0.0
    %111 = vmatpush1.msra.mxu0 0.0
    %112 = vmatprep.subr.mxu0 0.0
    %113 = vmatpush1.msra.mxu0 0.0
    %114 = vmatprep.subr.mxu0 0.0
    %115 = vmatpush1.msra.mxu0 0.0
    %116 = vmatprep.subr.mxu0 0.0
    %117 = vmatpush1.msra.mxu0 0.0
    %118 = vmatprep.subr.mxu0 0.0
    %119 = vmatpush1.msra.mxu0 0.0
    %120 = vmatprep.subr.mxu0 0.0
    %121 = vmatpush1.msra.mxu0 0.0
    %122 = vmatprep.subr.mxu0 0.0
    %123 = vmatpush1.msra.mxu0 0.0
    %124 = vmatprep.subr.mxu0 0.0
    %125 = vmatpush1.msra.mxu0 0.0
    %126 = vmatprep.subr.mxu0 %v73
    %127 = vmatpush1.msra.mxu0 %v72
    %128 = vmatprep.subr.mxu0 %v69
    %129 = vmatpush1.msra.mxu0 %v68
    %130 = vmatprep.subr.mxu0 %v65
    %131 = vmatpush1.msra.mxu0 %v64
    %132 = vmatprep.subr.mxu0 %v61
    %133 = vmatpush1.msra.mxu0 %v60
    %134 = vmatprep.subr.mxu0 0.0
    %135 = vmatpush2.msra.mxu0 0.0
    %136 = vmatprep.subr.mxu0 0.0
    %137 = vmatpush2.msra.mxu0 0.0
    %138 = vmatprep.subr.mxu0 0.0
    %139 = vmatpush2.msra.mxu0 0.0
    %140 = vmatprep.subr.mxu0 0.0
    %141 = vmatpush2.msra.mxu0 0.0
    %142 = vmatprep.subr.mxu0 0.0
    %143 = vmatpush2.msra.mxu0 0.0
    %144 = vmatprep.subr.mxu0 0.0
    %145 = vmatpush2.msra.mxu0 0.0
    %146 = vmatprep.subr.mxu0 0.0
    %147 = vmatpush2.msra.mxu0 0.0
    %148 = vmatprep.subr.mxu0 0.0
    %149 = vmatpush2.msra.mxu0 0.0
    %150 = vmatprep.subr.mxu0 0.0
    %151 = vmatpush2.msra.mxu0 0.0
    %152 = vmatprep.subr.mxu0 0.0
    %153 = vmatpush2.msra.mxu0 0.0
    %154 = vmatprep.subr.mxu0 0.0
    %155 = vmatpush2.msra.mxu0 0.0
    %156 = vmatprep.subr.mxu0 0.0
    %157 = vmatpush2.msra.mxu0 0.0
    %158 = vmatprep.subr.mxu0 0.0
    %159 = vmatpush2.msra.mxu0 0.0
    %160 = vmatprep.subr.mxu0 0.0
    %161 = vmatpush2.msra.mxu0 0.0
    %162 = vmatprep.subr.mxu0 0.0
    %163 = vmatpush2.msra.mxu0 0.0
    %164 = vmatprep.subr.mxu0 0.0
    %165 = vmatpush2.msra.mxu0 0.0
    %166 = vmatprep.mubr.f32.mxu0 0.0
    %167 = vmatmul.mubr.f32.gmra.mxu0 %v100
    %v168 = vpop.f32.mrf.mxu0
    %v169 = vadd.f32 %v81, %v168
    %v170 = vpop.f32.mrf.mxu0
    %v171 = vadd.f32 %v85, %v170
    %172 = vdwg.mxu0
    %173 = vmatprep.subr.mxu0 0.0
    %174 = vmatpush1.msra.mxu0 0.0
    %175 = vmatprep.subr.mxu0 0.0
    %176 = vmatpush1.msra.mxu0 0.0
    %177 = vmatprep.subr.mxu0 0.0
    %178 = vmatpush1.msra.mxu0 0.0
    %179 = vmatprep.subr.mxu0 0.0
    %180 = vmatpush1.msra.mxu0 0.0
    %181 = vmatprep.subr.mxu0 0.0
    %182 = vmatpush1.msra.mxu0 0.0
    %183 = vmatprep.subr.mxu0 0.0
    %184 = vmatpush1.msra.mxu0 0.0
    %185 = vmatprep.subr.mxu0 0.0
    %186 = vmatpush1.msra.mxu0 0.0
    %187 = vmatprep.subr.mxu0 0.0
    %188 = vmatpush1.msra.mxu0 0.0
    %189 = vmatprep.subr.mxu0 0.0
    %190 = vmatpush1.msra.mxu0 0.0
    %191 = vmatprep.subr.mxu0 0.0
    %192 = vmatpush1.msra.mxu0 0.0
    %193 = vmatprep.subr.mxu0 0.0
    %194 = vmatpush1.msra.mxu0 0.0
    %195 = vmatprep.subr.mxu0 0.0
    %196 = vmatpush1.msra.mxu0 0.0
    %197 = vmatprep.subr.mxu0 %v75
    %198 = vmatpush1.msra.mxu0 %v74
    %199 = vmatprep.subr.mxu0 %v71
    %200 = vmatpush1.msra.mxu0 %v70
    %201 = vmatprep.subr.mxu0 %v67
    %202 = vmatpush1.msra.mxu0 %v66
    %203 = vmatprep.subr.mxu0 %v63
    %204 = vmatpush1.msra.mxu0 %v62
    %205 = vmatprep.subr.mxu0 0.0
    %206 = vmatpush2.msra.mxu0 0.0
    %207 = vmatprep.subr.mxu0 0.0
    %208 = vmatpush2.msra.mxu0 0.0
    %209 = vmatprep.subr.mxu0 0.0
    %210 = vmatpush2.msra.mxu0 0.0
    %211 = vmatprep.subr.mxu0 0.0
    %212 = vmatpush2.msra.mxu0 0.0
    %213 = vmatprep.subr.mxu0 0.0
    %214 = vmatpush2.msra.mxu0 0.0
    %215 = vmatprep.subr.mxu0 0.0
    %216 = vmatpush2.msra.mxu0 0.0
    %217 = vmatprep.subr.mxu0 0.0
    %218 = vmatpush2.msra.mxu0 0.0
    %219 = vmatprep.subr.mxu0 0.0
    %220 = vmatpush2.msra.mxu0 0.0
    %221 = vmatprep.subr.mxu0 0.0
    %222 = vmatpush2.msra.mxu0 0.0
    %223 = vmatprep.subr.mxu0 0.0
    %224 = vmatpush2.msra.mxu0 0.0
    %225 = vmatprep.subr.mxu0 0.0
    %226 = vmatpush2.msra.mxu0 0.0
    %227 = vmatprep.subr.mxu0 0.0
    %228 = vmatpush2.msra.mxu0 0.0
    %229 = vmatprep.subr.mxu0 0.0
    %230 = vmatpush2.msra.mxu0 0.0
    %231 = vmatprep.subr.mxu0 0.0
    %232 = vmatpush2.msra.mxu0 0.0
    %233 = vmatprep.subr.mxu0 0.0
    %234 = vmatpush2.msra.mxu0 0.0
    %235 = vmatprep.subr.mxu0 0.0
    %236 = vmatpush2.msra.mxu0 0.0
    %237 = vmatprep.mubr.f32.mxu0 0.0
    %238 = vmatmul.mubr.f32.gmra.mxu0 %v100
    %v239 = vpop.f32.mrf.mxu0
    %v240 = vadd.f32 %v89, %v239
    %v241 = vpop.f32.mrf.mxu0
    %v242 = vadd.f32 %v93, %v241
    %243 = vdwg.mxu0
    %244 = vadd.xlane.f32.xlu0 %v242
    %v245 = vpop.xlane.xlu0 %244
    %246 = vadd.xlane.f32.xlu0 %v171
    %v247 = vpop.xlane.xlu0 %246
    %v248 = vmul.f32 %v247, 0.015625
    %v249 = vsub.f32 %v245, %v248
    %v250 = vadd.f32 %v171, %v249
    %251 = vst [vmem:[#allocation8] sm:$0xff] %v169
    %252 = vmax.xlane.f32.xlu0 %v169
    %v253 = vpop.xlane.xlu0 %252
    %v254 = vsub.f32 %v169, %v253
    %v255 = vmul.f32 %v254, 1.442695
    %v256 = vpow.pop %v255
    %257 = vadd.xlane.f32.xlu0 %v256
    %v258 = vpop.xlane.xlu0 %257
    %v259 = vlog2.pop %v258
    %v260 = vmul.f32 %v259, 0.6931472
    %v261 = vsub.f32 %v254, %v260
    %262 = vst [vmem:[#allocation9] sm:$0xff] %v261
    %263 = vst [vmem:[#allocation11] sm:$0xff] %v240
    %264 = vmax.xlane.f32.xlu0 %v240
    %v265 = vpop.xlane.xlu0 %264
    %v266 = vsub.f32 %v240, %v265
    %v267 = vmul.f32 %v266, 1.442695
    %v268 = vpow.pop %v267
    %269 = vadd.xlane.f32.xlu0 %v268
    %v270 = vpop.xlane.xlu0 %269
    %v271 = vlog2.pop %v270
    %v272 = vmul.f32 %v271, 0.6931472
    %v273 = vsub.f32 %v266, %v272
    %274 = vst [vmem:[#allocation12] sm:$0xff] %v273
    %275 = vst [vmem:[#allocation14] sm:$0xff] %v250
    // Predicated region
    $region26: #{tpu_custom_call.1} parent=1 // pred_check
      _
    $region27: #{tpu_custom_call.1} parent=1 // pred_check_branch
      %277 = sbr.rel (0) target = $region29
    $region28: #{tpu_custom_call.1} parent=1 // pred_region
      %s279 = ssub.s32 128, 128
      %280 = vsyncadd [#allocation4], %s279
      %s282 = sshll.u32 [#allocation8], 4
      %s283 = int_to_ptr.vmem [resolvable:$true] %s282
      %285 = dma.vmem_to_hbm [thread:$0]  %s283, 128, %s3, [#allocation4]
    $region29: #{tpu_custom_call.1} parent=1 // pred_fallthru
      _
    // Predicated region
    $region30: #{tpu_custom_call.1} parent=1 // pred_check
      _
    $region31: #{tpu_custom_call.1} parent=1 // pred_check_branch
      %287 = sbr.rel (0) target = $region33
    $region32: #{tpu_custom_call.1} parent=1 // pred_region
      %s289 = ssub.s32 128, 128
      %290 = vsyncadd [#allocation10], %s289
      %s292 = sshll.u32 [#allocation9], 4
      %s293 = int_to_ptr.vmem [resolvable:$true] %s292
      %295 = dma.vmem_to_hbm [thread:$0]  %s293, 128, %s4, [#allocation10]
    $region33: #{tpu_custom_call.1} parent=1 // pred_fallthru
      _
    // Predicated region
    $region34: #{tpu_custom_call.1} parent=1 // pred_check
      _
    $region35: #{tpu_custom_call.1} parent=1 // pred_check_branch
      %297 = sbr.rel (0) target = $region37
    $region36: #{tpu_custom_call.1} parent=1 // pred_region
      %s299 = ssub.s32 128, 128
      %300 = vsyncadd [#allocation10], %s299
      %s302 = sshll.u32 [#allocation11], 4
      %s303 = int_to_ptr.vmem [resolvable:$true] %s302
      %305 = dma.vmem_to_hbm [thread:$0]  %s303, 128, %s5, [#allocation10]
    $region37: #{tpu_custom_call.1} parent=1 // pred_fallthru
      _
    // Predicated region
    $region38: #{tpu_custom_call.1} parent=1 // pred_check
      _
    $region39: #{tpu_custom_call.1} parent=1 // pred_check_branch
      %307 = sbr.rel (0) target = $region41
    $region40: #{tpu_custom_call.1} parent=1 // pred_region
      %s309 = ssub.s32 128, 128
      %310 = vsyncadd [#allocation13], %s309
      %s312 = sshll.u32 [#allocation12], 4
      %s313 = int_to_ptr.vmem [resolvable:$true] %s312
      %315 = dma.vmem_to_hbm [thread:$0]  %s313, 128, %s6, [#allocation13]
    $region41: #{tpu_custom_call.1} parent=1 // pred_fallthru
      _
    // Predicated region
    $region42: #{tpu_custom_call.1} parent=1 // pred_check
      _
    $region43: #{tpu_custom_call.1} parent=1 // pred_check_branch
      %317 = sbr.rel (0) target = $region45
    $region44: #{tpu_custom_call.1} parent=1 // pred_region
      %s319 = ssub.s32 128, 128
      %320 = vsyncadd [#allocation13], %s319
      %s322 = sshll.u32 [#allocation14], 4
      %s323 = int_to_ptr.vmem [resolvable:$true] %s322
      %325 = dma.vmem_to_hbm [thread:$0]  %s323, 128, %s7, [#allocation13]
    $region45: #{tpu_custom_call.1} parent=1 // pred_fallthru
      _
    // Predicated region
    $region46: #{tpu_custom_call.1} parent=1 // pred_check
      _
    $region47: #{tpu_custom_call.1} parent=1 // pred_check_branch
      %327 = sbr.rel (0) target = $region49
    $region48: #{tpu_custom_call.1} parent=1 // pred_region
      %328 = dma.done [#allocation4], 128
    $region49: #{tpu_custom_call.1} parent=1 // pred_fallthru
      _
    // Predicated region
    $region50: #{tpu_custom_call.1} parent=1 // pred_check
      _
    $region51: #{tpu_custom_call.1} parent=1 // pred_check_branch
      %330 = sbr.rel (0) target = $region53
    $region52: #{tpu_custom_call.1} parent=1 // pred_region
      %331 = dma.done [#allocation10], 128
    $region53: #{tpu_custom_call.1} parent=1 // pred_fallthru
      _
    // Predicated region
    $region54: #{tpu_custom_call.1} parent=1 // pred_check
      _
    $region55: #{tpu_custom_call.1} parent=1 // pred_check_branch
      %333 = sbr.rel (0) target = $region57
    $region56: #{tpu_custom_call.1} parent=1 // pred_region
      %334 = dma.done [#allocation10], 128
    $region57: #{tpu_custom_call.1} parent=1 // pred_fallthru
      _
    // Predicated region
    $region58: #{tpu_custom_call.1} parent=1 // pred_check
      _
    $region59: #{tpu_custom_call.1} parent=1 // pred_check_branch
      %336 = sbr.rel (0) target = $region61
    $region60: #{tpu_custom_call.1} parent=1 // pred_region
      %337 = dma.done [#allocation13], 128
    $region61: #{tpu_custom_call.1} parent=1 // pred_fallthru
      _
    // Predicated region
    $region62: #{tpu_custom_call.1} parent=1 // pred_check
      _
    $region63: #{tpu_custom_call.1} parent=1 // pred_check_branch
      %339 = sbr.rel (0) target = $region65
    $region64: #{tpu_custom_call.1} parent=1 // pred_region
      %340 = dma.done [#allocation13], 128
    $region65: #{tpu_custom_call.1} parent=1 // pred_fallthru
      _
    %341 = vsyncpa [#allocation3], 1
    %342 = vsyncpa [#allocation6], 1
    %343 = vsyncpa [#allocation4], 1
    %344 = vsyncpa [#allocation10], 1
    %345 = vsyncpa [#allocation13], 1

// kernel: tpu_custom_call.1
$region0: #{tpu_custom_call.1}
  #allocation0 [shape = 'u32[]', space=smem, size = 0x4, offset = 0x4, fixed_abs, tag = 'smem constant byte address 0x4 - core index']
  #allocation1 [shape = 'u32[144,128]{1,0:T(1,128)}', space=vmem, size = 0x12000, scoped, tag = 'internal scratch']
  %s0 = inlined_call_operand.hbm [shape: f32[8,32], index: 0, kind: input, shape index: {}]
  %s1 = inlined_call_operand.hbm [shape: f32[32,512], index: 1, kind: input, shape index: {}]
  %s2 = inlined_call_operand.hbm [shape: f32[1,512], index: 2, kind: input, shape index: {}]
  %s3 = inlined_call_operand.hbm [shape: f32[8,128], index: 3, kind: output, shape index: {0}]
  %s4 = inlined_call_operand.hbm [shape: f32[8,128], index: 4, kind: output, shape index: {1}]
  %s5 = inlined_call_operand.hbm [shape: f32[8,128], index: 5, kind: output, shape index: {2}]
  %s6 = inlined_call_operand.hbm [shape: f32[8,128], index: 6, kind: output, shape index: {3}]
  %s7 = inlined_call_operand.hbm [shape: f32[8,128], index: 7, kind: output, shape index: {4}]
  %8 = xla_tuple %s3, %s4, %s5, %s6, %s7
  %s9 = sld [smem:[#allocation0]]
  $region66: #{tpu_custom_call.1} parent=0
    _
  %s11 = ssub.s32 1, %s9
  %s12 = scalar_select 0, %s11, %s9
  $region1: #{tpu_custom_call.1} parent=0
    #allocation2 [shape = 'u8[4096]{0}', space=vmem, size = 0x1000, scoped, tag = 'input window, operand 0, single buffered']
    #allocation3 [shape = 's32[1]{0}', space=sflag, size = 0x4, scoped, tag = 'scoped memory for tpu_custom_call.1']
    #allocation4 [shape = 's32[1]{0}', space=sflag, size = 0x4, scoped, tag = 'scoped memory for tpu_custom_call.1']
    #allocation5 [shape = 'u8[65536]{0}', space=vmem, size = 0x10000, scoped, tag = 'input window, operand 1, single buffered']
    #allocation6 [shape = 's32[1]{0}', space=sflag, size = 0x4, scoped, tag = 'scoped memory for tpu_custom_call.1']
    #allocation7 [shape = 'u8[2048]{0}', space=vmem, size = 0x800, scoped, tag = 'input window, operand 2, single buffered']
    #allocation8 [shape = 'u8[4096]{0}', space=vmem, size = 0x1000, scoped, tag = 'output window, operand 0, single buffered']
    #allocation9 [shape = 'u8[4096]{0}', space=vmem, size = 0x1000, scoped, tag = 'output window, operand 1, single buffered']
    #allocation10 [shape = 's32[1]{0}', space=sflag, size = 0x4, scoped, tag = 'scoped memory for tpu_custom_call.1']
    #allocation11 [shape = 'u8[4096]{0}', space=vmem, size = 0x1000, scoped, tag = 'output window, operand 2, single buffered']
    #allocation12 [shape = 'u8[4096]{0}', space=vmem, size = 0x1000, scoped, tag = 'output window, operand 3, single buffered']
    #allocation13 [shape = 's32[1]{0}', space=sflag, size = 0x4, scoped, tag = 'scoped memory for tpu_custom_call.1']
    #allocation14 [shape = 'u8[4096]{0}', space=vmem, size = 0x1000, scoped, tag = 'output window, operand 4, single buffered']
    %13 = vsyncpa [#allocation3], 0
    %14 = vsyncpa [#allocation6], 0
    %15 = vsyncpa [#allocation4], 0
    %16 = vsyncpa [#allocation10], 0
    %17 = vsyncpa [#allocation13], 0
    // Predicated region
    $region2: #{tpu_custom_call.1} parent=1 // pred_check
      _
    $region3: #{tpu_custom_call.1} parent=1 // pred_check_branch
      %19 = sbr.rel (0) target = $region5
    $region4: #{tpu_custom_call.1} parent=1 // pred_region
      %s21 = ssub.s32 128, 128
      %22 = vsyncadd [#allocation3], %s21
      %s24 = sshll.u32 [#allocation2], 4
      %s25 = int_to_ptr.vmem [resolvable:$true] %s24
      %27 = dma.hbm_to_vmem [thread:$0]  %s0, 128, %s25, [#allocation3]
    $region5: #{tpu_custom_call.1} parent=1 // pred_fallthru
      _
    // Predicated region
    $region6: #{tpu_custom_call.1} parent=1 // pred_check
      _
    $region7: #{tpu_custom_call.1} parent=1 // pred_check_branch
      %29 = sbr.rel (0) target = $region9
    $region8: #{tpu_custom_call.1} parent=1 // pred_region
      %s31 = ssub.s32 2048, 2048
      %32 = vsyncadd [#allocation6], %s31
      %s33 = sshll.u32 [#allocation5], 4
      %s34 = int_to_ptr.vmem [resolvable:$true] %s33
      %39 = dma.hbm_to_vmem [thread:$0]  %s1, 2048, %s34, [#allocation6], 512, 512, 32
    $region9: #{tpu_custom_call.1} parent=1 // pred_fallthru
      _
    // Predicated region
    $region10: #{tpu_custom_call.1} parent=1 // pred_check
      _
    $region11: #{tpu_custom_call.1} parent=1 // pred_check_branch
      %41 = sbr.rel (0) target = $region13
    $region12: #{tpu_custom_call.1} parent=1 // pred_region
      %s43 = ssub.s32 64, 64
      %44 = vsyncadd [#allocation6], %s43
      %s46 = sshll.u32 [#allocation7], 4
      %s47 = int_to_ptr.vmem [resolvable:$true] %s46
      %49 = dma.hbm_to_vmem [thread:$0]  %s2, 64, %s47, [#allocation6]
    $region13: #{tpu_custom_call.1} parent=1 // pred_fallthru
      _
    // Predicated region
    $region14: #{tpu_custom_call.1} parent=1 // pred_check
      _
    $region15: #{tpu_custom_call.1} parent=1 // pred_check_branch
      %51 = sbr.rel (0) target = $region17
    $region16: #{tpu_custom_call.1} parent=1 // pred_region
      %52 = dma.done [#allocation3], 128
    $region17: #{tpu_custom_call.1} parent=1 // pred_fallthru
      _
    // Predicated region
    $region18: #{tpu_custom_call.1} parent=1 // pred_check
      _
    $region19: #{tpu_custom_call.1} parent=1 // pred_check_branch
      %54 = sbr.rel (0) target = $region21
    $region20: #{tpu_custom_call.1} parent=1 // pred_region
      %55 = dma.done [#allocation6], 2048
    $region21: #{tpu_custom_call.1} parent=1 // pred_fallthru
      _
    // Predicated region
    $region22: #{tpu_custom_call.1} parent=1 // pred_check
      _
    $region23: #{tpu_custom_call.1} parent=1 // pred_check_branch
      %57 = sbr.rel (0) target = $region25
    $region24: #{tpu_custom_call.1} parent=1 // pred_region
      %58 = dma.done [#allocation6], 64
    $region25: #{tpu_custom_call.1} parent=1 // pred_fallthru
      _
    %v59 = vld [vmem:[#allocation2] sm:$0xff]
    %v60 = vld [vmem:[#allocation5] sm:$0xff]
    %v61 = vld [vmem:[#allocation5 + $0x8] sm:$0xff]
    %v62 = vld [vmem:[#allocation5 + $0x10] sm:$0xff]
    %v63 = vld [vmem:[#allocation5 + $0x18] sm:$0xff]
    %v64 = vld [vmem:[#allocation5 + $0x20] sm:$0xff]
    %v65 = vld [vmem:[#allocation5 + $0x28] sm:$0xff]
    %v66 = vld [vmem:[#allocation5 + $0x30] sm:$0xff]
    %v67 = vld [vmem:[#allocation5 + $0x38] sm:$0xff]
    %v68 = vld [vmem:[#allocation5 + $0x40] sm:$0xff]
    %v69 = vld [vmem:[#allocation5 + $0x48] sm:$0xff]
    %v70 = vld [vmem:[#allocation5 + $0x50] sm:$0xff]
    %v71 = vld [vmem:[#allocation5 + $0x58] sm:$0xff]
    %v72 = vld [vmem:[#allocation5 + $0x60] sm:$0xff]
    %v73 = vld [vmem:[#allocation5 + $0x68] sm:$0xff]
    %v74 = vld [vmem:[#allocation5 + $0x70] sm:$0xff]
    %v75 = vld [vmem:[#allocation5 + $0x78] sm:$0xff]
    %v76 = vld [vmem:[#allocation7] sm:$0xf]
    %v78 = vlaneseq
    %v79 = vshrl.u32 %v78, 7
    %v80 = vsub.s32 0, %v79
    %v81 = vrot.slane %v76, %v80
    %v82 = vlaneseq
    %v83 = vshrl.u32 %v82, 7
    %v84 = vsub.s32 1, %v83
    %v85 = vrot.slane %v76, %v84
    %v86 = vlaneseq
    %v87 = vshrl.u32 %v86, 7
    %v88 = vsub.s32 2, %v87
    %v89 = vrot.slane %v76, %v88
    %v90 = vlaneseq
    %v91 = vshrl.u32 %v90, 7
    %v92 = vsub.s32 3, %v91
    %v93 = vrot.slane %v76, %v92
    %vm98 = vcmask 261120
    %v100 = vsel %vm98, %v59, 0
    %102 = vmatprep.subr.mxu0 0.0
    %103 = vmatpush1.msra.mxu0 0.0
    %104 = vmatprep.subr.mxu0 0.0
    %105 = vmatpush1.msra.mxu0 0.0
    %106 = vmatprep.subr.mxu0 0.0
    %107 = vmatpush1.msra.mxu0 0.0
    %108 = vmatprep.subr.mxu0 0.0
    %109 = vmatpush1.msra.mxu0 0.0
    %110 = vmatprep.subr.mxu0 0.0
    %111 = vmatpush1.msra.mxu0 0.0
    %112 = vmatprep.subr.mxu0 0.0
    %113 = vmatpush1.msra.mxu0 0.0
    %114 = vmatprep.subr.mxu0 0.0
    %115 = vmatpush1.msra.mxu0 0.0
    %116 = vmatprep.subr.mxu0 0.0
    %117 = vmatpush1.msra.mxu0 0.0
    %118 = vmatprep.subr.mxu0 0.0
    %119 = vmatpush1.msra.mxu0 0.0
    %120 = vmatprep.subr.mxu0 0.0
    %121 = vmatpush1.msra.mxu0 0.0
    %122 = vmatprep.subr.mxu0 0.0
    %123 = vmatpush1.msra.mxu0 0.0
    %124 = vmatprep.subr.mxu0 0.0
    %125 = vmatpush1.msra.mxu0 0.0
    %126 = vmatprep.subr.mxu0 %v73
    %127 = vmatpush1.msra.mxu0 %v72
    %128 = vmatprep.subr.mxu0 %v69
    %129 = vmatpush1.msra.mxu0 %v68
    %130 = vmatprep.subr.mxu0 %v65
    %131 = vmatpush1.msra.mxu0 %v64
    %132 = vmatprep.subr.mxu0 %v61
    %133 = vmatpush1.msra.mxu0 %v60
    %134 = vmatprep.subr.mxu0 0.0
    %135 = vmatpush2.msra.mxu0 0.0
    %136 = vmatprep.subr.mxu0 0.0
    %137 = vmatpush2.msra.mxu0 0.0
    %138 = vmatprep.subr.mxu0 0.0
    %139 = vmatpush2.msra.mxu0 0.0
    %140 = vmatprep.subr.mxu0 0.0
    %141 = vmatpush2.msra.mxu0 0.0
    %142 = vmatprep.subr.mxu0 0.0
    %143 = vmatpush2.msra.mxu0 0.0
    %144 = vmatprep.subr.mxu0 0.0
    %145 = vmatpush2.msra.mxu0 0.0
    %146 = vmatprep.subr.mxu0 0.0
    %147 = vmatpush2.msra.mxu0 0.0
    %148 = vmatprep.subr.mxu0 0.0
    %149 = vmatpush2.msra.mxu0 0.0
    %150 = vmatprep.subr.mxu0 0.0
    %151 = vmatpush2.msra.mxu0 0.0
    %152 = vmatprep.subr.mxu0 0.0
    %153 = vmatpush2.msra.mxu0 0.0
    %154 = vmatprep.subr.mxu0 0.0
    %155 = vmatpush2.msra.mxu0 0.0
    %156 = vmatprep.subr.mxu0 0.0
    %157 = vmatpush2.msra.mxu0 0.0
    %158 = vmatprep.subr.mxu0 0.0
    %159 = vmatpush2.msra.mxu0 0.0
    %160 = vmatprep.subr.mxu0 0.0
    %161 = vmatpush2.msra.mxu0 0.0
    %162 = vmatprep.subr.mxu0 0.0
    %163 = vmatpush2.msra.mxu0 0.0
    %164 = vmatprep.subr.mxu0 0.0
    %165 = vmatpush2.msra.mxu0 0.0
    %166 = vmatprep.mubr.f32.mxu0 0.0
    %167 = vmatmul.mubr.f32.gmra.mxu0 %v100
    %v168 = vpop.f32.mrf.mxu0
    %v169 = vadd.f32 %v81, %v168
    %v170 = vpop.f32.mrf.mxu0
    %v171 = vadd.f32 %v85, %v170
    %172 = vdwg.mxu0
    %173 = vmatprep.subr.mxu0 0.0
    %174 = vmatpush1.msra.mxu0 0.0
    %175 = vmatprep.subr.mxu0 0.0
    %176 = vmatpush1.msra.mxu0 0.0
    %177 = vmatprep.subr.mxu0 0.0
    %178 = vmatpush1.msra.mxu0 0.0
    %179 = vmatprep.subr.mxu0 0.0
    %180 = vmatpush1.msra.mxu0 0.0
    %181 = vmatprep.subr.mxu0 0.0
    %182 = vmatpush1.msra.mxu0 0.0
    %183 = vmatprep.subr.mxu0 0.0
    %184 = vmatpush1.msra.mxu0 0.0
    %185 = vmatprep.subr.mxu0 0.0
    %186 = vmatpush1.msra.mxu0 0.0
    %187 = vmatprep.subr.mxu0 0.0
    %188 = vmatpush1.msra.mxu0 0.0
    %189 = vmatprep.subr.mxu0 0.0
    %190 = vmatpush1.msra.mxu0 0.0
    %191 = vmatprep.subr.mxu0 0.0
    %192 = vmatpush1.msra.mxu0 0.0
    %193 = vmatprep.subr.mxu0 0.0
    %194 = vmatpush1.msra.mxu0 0.0
    %195 = vmatprep.subr.mxu0 0.0
    %196 = vmatpush1.msra.mxu0 0.0
    %197 = vmatprep.subr.mxu0 %v75
    %198 = vmatpush1.msra.mxu0 %v74
    %199 = vmatprep.subr.mxu0 %v71
    %200 = vmatpush1.msra.mxu0 %v70
    %201 = vmatprep.subr.mxu0 %v67
    %202 = vmatpush1.msra.mxu0 %v66
    %203 = vmatprep.subr.mxu0 %v63
    %204 = vmatpush1.msra.mxu0 %v62
    %205 = vmatprep.subr.mxu0 0.0
    %206 = vmatpush2.msra.mxu0 0.0
    %207 = vmatprep.subr.mxu0 0.0
    %208 = vmatpush2.msra.mxu0 0.0
    %209 = vmatprep.subr.mxu0 0.0
    %210 = vmatpush2.msra.mxu0 0.0
    %211 = vmatprep.subr.mxu0 0.0
    %212 = vmatpush2.msra.mxu0 0.0
    %213 = vmatprep.subr.mxu0 0.0
    %214 = vmatpush2.msra.mxu0 0.0
    %215 = vmatprep.subr.mxu0 0.0
    %216 = vmatpush2.msra.mxu0 0.0
    %217 = vmatprep.subr.mxu0 0.0
    %218 = vmatpush2.msra.mxu0 0.0
    %219 = vmatprep.subr.mxu0 0.0
    %220 = vmatpush2.msra.mxu0 0.0
    %221 = vmatprep.subr.mxu0 0.0
    %222 = vmatpush2.msra.mxu0 0.0
    %223 = vmatprep.subr.mxu0 0.0
    %224 = vmatpush2.msra.mxu0 0.0
    %225 = vmatprep.subr.mxu0 0.0
    %226 = vmatpush2.msra.mxu0 0.0
    %227 = vmatprep.subr.mxu0 0.0
    %228 = vmatpush2.msra.mxu0 0.0
    %229 = vmatprep.subr.mxu0 0.0
    %230 = vmatpush2.msra.mxu0 0.0
    %231 = vmatprep.subr.mxu0 0.0
    %232 = vmatpush2.msra.mxu0 0.0
    %233 = vmatprep.subr.mxu0 0.0
    %234 = vmatpush2.msra.mxu0 0.0
    %235 = vmatprep.subr.mxu0 0.0
    %236 = vmatpush2.msra.mxu0 0.0
    %237 = vmatprep.mubr.f32.mxu0 0.0
    %238 = vmatmul.mubr.f32.gmra.mxu0 %v100
    %v239 = vpop.f32.mrf.mxu0
    %v240 = vadd.f32 %v89, %v239
    %v241 = vpop.f32.mrf.mxu0
    %v242 = vadd.f32 %v93, %v241
    %243 = vdwg.mxu0
    %244 = vadd.xlane.f32.xlu0 %v242
    %v245 = vpop.xlane.xlu0 %244
    %246 = vadd.xlane.f32.xlu0 %v171
    %v247 = vpop.xlane.xlu0 %246
    %v248 = vmul.f32 %v247, 0.015625
    %v249 = vsub.f32 %v245, %v248
    %v250 = vadd.f32 %v171, %v249
    %251 = vst [vmem:[#allocation8] sm:$0xff] %v169
    %252 = vmax.xlane.f32.xlu0 %v169
    %v253 = vpop.xlane.xlu0 %252
    %v254 = vsub.f32 %v169, %v253
    %v255 = vmul.f32 %v254, 1.442695
    %v256 = vpow.pop %v255
    %257 = vadd.xlane.f32.xlu0 %v256
    %v258 = vpop.xlane.xlu0 %257
    %v259 = vlog2.pop %v258
    %v260 = vmul.f32 %v259, 0.6931472
    %v261 = vsub.f32 %v254, %v260
    %262 = vst [vmem:[#allocation9] sm:$0xff] %v261
    %263 = vst [vmem:[#allocation11] sm:$0xff] %v240
    %264 = vmax.xlane.f32.xlu0 %v240
    %v265 = vpop.xlane.xlu0 %264
    %v266 = vsub.f32 %v240, %v265
    %v267 = vmul.f32 %v266, 1.442695
    %v268 = vpow.pop %v267
    %269 = vadd.xlane.f32.xlu0 %v268
    %v270 = vpop.xlane.xlu0 %269
    %v271 = vlog2.pop %v270
    %v272 = vmul.f32 %v271, 0.6931472
    %v273 = vsub.f32 %v266, %v272
    %274 = vst [vmem:[#allocation12] sm:$0xff] %v273
    %275 = vst [vmem:[#allocation14] sm:$0xff] %v250
    // Predicated region
    $region26: #{tpu_custom_call.1} parent=1 // pred_check
      _
    $region27: #{tpu_custom_call.1} parent=1 // pred_check_branch
      %277 = sbr.rel (0) target = $region29
    $region28: #{tpu_custom_call.1} parent=1 // pred_region
      %s279 = ssub.s32 128, 128
      %280 = vsyncadd [#allocation4], %s279
      %s282 = sshll.u32 [#allocation8], 4
      %s283 = int_to_ptr.vmem [resolvable:$true] %s282
      %285 = dma.vmem_to_hbm [thread:$0]  %s283, 128, %s3, [#allocation4]
    $region29: #{tpu_custom_call.1} parent=1 // pred_fallthru
      _
    // Predicated region
    $region30: #{tpu_custom_call.1} parent=1 // pred_check
      _
    $region31: #{tpu_custom_call.1} parent=1 // pred_check_branch
      %287 = sbr.rel (0) target = $region33
    $region32: #{tpu_custom_call.1} parent=1 // pred_region
      %s289 = ssub.s32 128, 128
      %290 = vsyncadd [#allocation10], %s289
      %s292 = sshll.u32 [#allocation9], 4
      %s293 = int_to_ptr.vmem [resolvable:$true] %s292
      %295 = dma.vmem_to_hbm [thread:$0]  %s293, 128, %s4, [#allocation10]
    $region33: #{tpu_custom_call.1} parent=1 // pred_fallthru
      _
    // Predicated region
    $region34: #{tpu_custom_call.1} parent=1 // pred_check
      _
    $region35: #{tpu_custom_call.1} parent=1 // pred_check_branch
      %297 = sbr.rel (0) target = $region37
    $region36: #{tpu_custom_call.1} parent=1 // pred_region
      %s299 = ssub.s32 128, 128
      %300 = vsyncadd [#allocation10], %s299
      %s302 = sshll.u32 [#allocation11], 4
      %s303 = int_to_ptr.vmem [resolvable:$true] %s302
      %305 = dma.vmem_to_hbm [thread:$0]  %s303, 128, %s5, [#allocation10]
    $region37: #{tpu_custom_call.1} parent=1 // pred_fallthru
      _
    // Predicated region
    $region38: #{tpu_custom_call.1} parent=1 // pred_check
      _
    $region39: #{tpu_custom_call.1} parent=1 // pred_check_branch
      %307 = sbr.rel (0) target = $region41
    $region40: #{tpu_custom_call.1} parent=1 // pred_region
      %s309 = ssub.s32 128, 128
      %310 = vsyncadd [#allocation13], %s309
      %s312 = sshll.u32 [#allocation12], 4
      %s313 = int_to_ptr.vmem [resolvable:$true] %s312
      %315 = dma.vmem_to_hbm [thread:$0]  %s313, 128, %s6, [#allocation13]
    $region41: #{tpu_custom_call.1} parent=1 // pred_fallthru
      _
    // Predicated region
    $region42: #{tpu_custom_call.1} parent=1 // pred_check
      _
    $region43: #{tpu_custom_call.1} parent=1 // pred_check_branch
      %317 = sbr.rel (0) target = $region45
    $region44: #{tpu_custom_call.1} parent=1 // pred_region
      %s319 = ssub.s32 128, 128
      %320 = vsyncadd [#allocation13], %s319
      %s322 = sshll.u32 [#allocation14], 4
      %s323 = int_to_ptr.vmem [resolvable:$true] %s322
      %325 = dma.vmem_to_hbm [thread:$0]  %s323, 128, %s7, [#allocation13]
    $region45: #{tpu_custom_call.1} parent=1 // pred_fallthru
      _
    // Predicated region
    $region46: #{tpu_custom_call.1} parent=1 // pred_check
      _
    $region47: #{tpu_custom_call.1} parent=1 // pred_check_branch
      %327 = sbr.rel (0) target = $region49
    $region48: #{tpu_custom_call.1} parent=1 // pred_region
      %328 = dma.done [#allocation4], 128
    $region49: #{tpu_custom_call.1} parent=1 // pred_fallthru
      _
    // Predicated region
    $region50: #{tpu_custom_call.1} parent=1 // pred_check
      _
    $region51: #{tpu_custom_call.1} parent=1 // pred_check_branch
      %330 = sbr.rel (0) target = $region53
    $region52: #{tpu_custom_call.1} parent=1 // pred_region
      %331 = dma.done [#allocation10], 128
    $region53: #{tpu_custom_call.1} parent=1 // pred_fallthru
      _
    // Predicated region
    $region54: #{tpu_custom_call.1} parent=1 // pred_check
      _
    $region55: #{tpu_custom_call.1} parent=1 // pred_check_branch
      %333 = sbr.rel (0) target = $region57
    $region56: #{tpu_custom_call.1} parent=1 // pred_region
      %334 = dma.done [#allocation10], 128
    $region57: #{tpu_custom_call.1} parent=1 // pred_fallthru
      _
    // Predicated region
    $region58: #{tpu_custom_call.1} parent=1 // pred_check
      _
    $region59: #{tpu_custom_call.1} parent=1 // pred_check_branch
      %336 = sbr.rel (0) target = $region61
    $region60: #{tpu_custom_call.1} parent=1 // pred_region
      %337 = dma.done [#allocation13], 128
    $region61: #{tpu_custom_call.1} parent=1 // pred_fallthru
      _
    // Predicated region
    $region62: #{tpu_custom_call.1} parent=1 // pred_check
      _
    $region63: #{tpu_custom_call.1} parent=1 // pred_check_branch
      %339 = sbr.rel (0) target = $region65
    $region64: #{tpu_custom_call.1} parent=1 // pred_region
      %340 = dma.done [#allocation13], 128
    $region65: #{tpu_custom_call.1} parent=1 // pred_fallthru
      _
    %341 = vsyncpa [#allocation3], 1
    %342 = vsyncpa [#allocation6], 1
    %343 = vsyncpa [#allocation4], 1
    %344 = vsyncpa [#allocation10], 1
    %345 = vsyncpa [#allocation13], 1

</llo_original>
